<compile_context>
chip_gen: v5e
topology: v5e:2x2
jax: 0.10.0
libtpu: 0.0.40
codegen_flags: <defaults>
</compile_context>

<pallas_src>
import functools
import math

import jax
import jax.numpy as jnp
from jax.experimental import pallas as pl
from jax.experimental.pallas import tpu as pltpu


def _round_up(x, m):
    return ((x + m - 1) // m) * m


def _cdiv(a, b):
    return (a + b - 1) // b


def _nbytes(a):
    return int(a.size) * a.dtype.itemsize


def _timestep_embedder_kernel(t_ref, w1c_ref, w1s_ref, b1_ref, w2_ref, b2_ref,
                              o_ref, *, half, max_period):
    # t_ref:   (TN, 1)          f32 timesteps
    # w1c_ref: (half, H_pad)    bf16  -- W1 rows hit by cos(args)
    # w1s_ref: (half, H_pad)    bf16  -- W1 rows hit by sin(args)
    # b1_ref:  (1, H_pad)       f32
    # w2_ref:  (H_pad, TH)      bf16  (TH == H_pad when not column-tiled)
    # b2_ref:  (1, TH)          f32
    # o_ref:   (TN, TH)         out_dtype
    t = t_ref[...]                                                    # (TN, 1)

    # In-kernel frequency table: exp goes to the otherwise-idle EUP slot.
    k = jax.lax.broadcasted_iota(jnp.int32, (1, half), 1).astype(jnp.float32)
    freqs = jnp.exp(k * (-math.log(max_period) / half))               # (1, half)

    args = t * freqs                                                  # (TN, half) f32
    cos_e = jnp.cos(args).astype(w1c_ref.dtype)
    sin_e = jnp.sin(args).astype(w1s_ref.dtype)

    # Linear 1 (split-weight dots avoid materializing concat([cos, sin])) + SiLU.
    h = (jnp.dot(cos_e, w1c_ref[...], preferred_element_type=jnp.float32)
         + jnp.dot(sin_e, w1s_ref[...], preferred_element_type=jnp.float32)
         + b1_ref[...])
    h = h * jax.nn.sigmoid(h)                                         # SiLU in f32

    # Linear 2 (bf16 MXU operands, f32 accumulation).
    out = jnp.dot(h.astype(w2_ref.dtype), w2_ref[...],
                  preferred_element_type=jnp.float32) + b2_ref[...]
    o_ref[...] = out.astype(o_ref.dtype)


def prepare_timestep_embedder_params(params, frequency_embedding_size=256,
                                     weight_dtype=jnp.bfloat16):
    """One-time preprocessing of the MLP weights (call once at model init).

    params = (w1, b1, w2, b2) with w1: (F, H), b1: (H,), w2: (H, H), b2: (H,)
    (nn.Linear weights pre-transposed to (in_features, out_features)).
    """
    w1, b1, w2, b2 = params
    # TODO(synk): odd frequency_embedding_size would need the PyTorch zero-pad column.
    assert frequency_embedding_size % 2 == 0
    half = frequency_embedding_size // 2
    hidden_size = w1.shape[1]

    f32 = jnp.float32
    h_pad = _round_up(max(hidden_size, 128), 128)   # lane-dense output columns
    pad_h = h_pad - hidden_size

    prepared = {
        "w1c": jnp.pad(w1[:half], ((0, 0), (0, pad_h))).astype(weight_dtype),
        "w1s": jnp.pad(w1[half:], ((0, 0), (0, pad_h))).astype(weight_dtype),
        "b1": jnp.pad(b1.astype(f32), (0, pad_h)).reshape(1, h_pad),
        "w2": jnp.pad(w2, ((0, pad_h), (0, pad_h))).astype(weight_dtype),
        "b2": jnp.pad(b2.astype(f32), (0, pad_h)).reshape(1, h_pad),
        "hidden_size": hidden_size,
        "h_pad": h_pad,
        "half": half,
        "frequency_embedding_size": frequency_embedding_size,
    }
    return prepared


def _default_column_tiles(h_pad):
    """Only v7x has 2 TensorCores per chip; column-split the weights there."""
    try:
        kind = jax.devices()[0].device_kind.lower()
    except Exception:
        return 1
    if "v7" in kind and h_pad >= 256 and h_pad % 256 == 0:
        return 2
    return 1


def _single_buffer_kwargs():
    buffered = getattr(pl, "Buffered", None)
    if buffered is None:
        return {}
    return {"pipeline_mode": buffered(1)}


def timestep_embedder(t, prepared, *, max_period=10000,
                      out_dtype=jnp.float32, column_tiles=None):
    """t: (N,) -> (N, hidden_size) in `out_dtype`.

    `prepared` comes from prepare_timestep_embedder_params (weights already
    padded / cast; no per-call weight preprocessing).
    """
    w1c, w1s, b1p, w2p, b2p = (prepared["w1c"], prepared["w1s"], prepared["b1"],
                               prepared["w2"], prepared["b2"])
    hidden_size = prepared["hidden_size"]
    h_pad = prepared["h_pad"]
    half = prepared["half"]
    frequency_embedding_size = prepared["frequency_embedding_size"]

    f32 = jnp.float32
    n = t.shape[0]

    # Batch tile: multiple of 8, chosen to minimize padding (cap at 256 rows).
    n_batch_tiles = max(_cdiv(n, 256), 1)
    tn = _round_up(max(_cdiv(n, n_batch_tiles), 1), 8)
    n_pad = _round_up(max(n, tn), tn)
    n_batch_tiles = n_pad // tn

    # Column tiling across H (v7x dual-TC only); th stays a multiple of 128.
    if column_tiles is None:
        column_tiles = _default_column_tiles(h_pad)
    if column_tiles < 1 or h_pad % (column_tiles * 128) != 0:
        column_tiles = 1
    th = h_pad // column_tiles

    t_pad = jnp.zeros((n_pad, 1), f32).at[:n, 0].set(t.astype(f32))

    kernel = functools.partial(_timestep_embedder_kernel,
                               half=half, max_period=max_period)

    sb = _single_buffer_kwargs()   # single-buffer resident weights

    if column_tiles == 1:
        grid = (n_batch_tiles,)
        in_specs = [
            pl.BlockSpec((tn, 1), lambda i: (i, 0)),                      # t (tiled)
            pl.BlockSpec((half, h_pad), lambda i: (0, 0), **sb),          # w1_cos
            pl.BlockSpec((half, h_pad), lambda i: (0, 0), **sb),          # w1_sin
            pl.BlockSpec((1, h_pad), lambda i: (0, 0), **sb),             # b1
            pl.BlockSpec((h_pad, h_pad), lambda i: (0, 0), **sb),         # w2
            pl.BlockSpec((1, h_pad), lambda i: (0, 0), **sb),             # b2
        ]
        out_specs = pl.BlockSpec((tn, h_pad), lambda i: (i, 0))
        dim_sem = ("parallel",)
        w2_bufs = 1 if sb else 2
    else:
        grid = (n_batch_tiles, column_tiles)
        in_specs = [
            pl.BlockSpec((tn, 1), lambda i, j: (i, 0)),                   # t (tiled)
            pl.BlockSpec((half, h_pad), lambda i, j: (0, 0), **sb),       # w1_cos
            pl.BlockSpec((half, h_pad), lambda i, j: (0, 0), **sb),       # w1_sin
            pl.BlockSpec((1, h_pad), lambda i, j: (0, 0), **sb),          # b1
            pl.BlockSpec((h_pad, th), lambda i, j: (0, j)),               # w2 cols
            pl.BlockSpec((1, th), lambda i, j: (0, j)),                   # b2 cols
        ]
        out_specs = pl.BlockSpec((tn, th), lambda i, j: (i, j))
        dim_sem = ("parallel", "parallel")
        w2_bufs = 2   # w2 block index changes with j -> keep it double-buffered

    # VMEM budget from actual residency: resident weights x1, streamed tiles x2.
    out_itemsize = jnp.dtype(out_dtype).itemsize
    wdt = w2p.dtype.itemsize
    resident_bytes = _nbytes(w1c) + _nbytes(w1s) + _nbytes(b1p)
    w2_block_bytes = h_pad * th * wdt + th * 4
    streamed_bytes = 2 * (tn * 4 + tn * th * out_itemsize)
    vmem_needed = resident_bytes + w2_bufs * w2_block_bytes + streamed_bytes + (1 << 20)

    try:
        phys_vmem = int(pltpu.get_tpu_info().vmem_capacity_bytes)
    except Exception:
        phys_vmem = 64 << 20       # conservative (v7x per-TC physical VMEM)
    vmem_cap = max(phys_vmem - (8 << 20), 24 << 20)
    vmem_limit = int(min(max(vmem_needed, 32 << 20), vmem_cap))

    flops = 2 * n_pad * (column_tiles * frequency_embedding_size * h_pad
                         + h_pad * h_pad)
    transcendentals = n_pad * column_tiles * (2 * half + h_pad) + half
    weight_bytes = (_nbytes(w1c) + _nbytes(w1s) + _nbytes(w2p)
                    + _nbytes(b1p) + _nbytes(b2p))
    bytes_accessed = _nbytes(t_pad) + weight_bytes + n_pad * h_pad * out_itemsize

    out = pl.pallas_call(
        kernel,
        out_shape=jax.ShapeDtypeStruct((n_pad, h_pad), out_dtype),
        grid=grid,
        in_specs=in_specs,
        out_specs=out_specs,
        compiler_params=pltpu.CompilerParams(
            dimension_semantics=dim_sem,
            vmem_limit_bytes=vmem_limit),
        cost_estimate=pl.CostEstimate(
            flops=int(flops),
            transcendentals=int(transcendentals),
            bytes_accessed=int(bytes_accessed)),
    )(t_pad, w1c, w1s, b1p, w2p, b2p)
    return out[:n, :hidden_size]


def timestep_embedder_ref(t, params, frequency_embedding_size=256, max_period=10000):
    """Pure-JAX f32 reference matching the PyTorch module."""
    w1, b1, w2, b2 = params
    half = frequency_embedding_size // 2
    freqs = jnp.exp(
        -math.log(max_period) * jnp.arange(half, dtype=jnp.float32) / half
    )
    args = t.astype(jnp.float32)[:, None] * freqs[None, :]
    emb = jnp.concatenate([jnp.cos(args), jnp.sin(args)], axis=-1)
    h = emb @ w1 + b1
    h = h * jax.nn.sigmoid(h)
    return h @ w2 + b2


if __name__ == "__main__":
    hidden_size = 32
    frequency_embedding_size = 256
    n = 8  # batch of timesteps

    key = jax.random.PRNGKey(0)
    k_t, k_w1, k_b1, k_w2, k_b2 = jax.random.split(key, 5)

    # Deterministic synthetic parameters (shapes follow nn.Linear in the module,
    # pre-transposed to (in_features, out_features)).
    w1 = jax.random.normal(k_w1, (frequency_embedding_size, hidden_size), jnp.float32) * 0.02
    b1 = jax.random.normal(k_b1, (hidden_size,), jnp.float32) * 0.02
    w2 = jax.random.normal(k_w2, (hidden_size, hidden_size), jnp.float32) * 0.02
    b2 = jax.random.normal(k_b2, (hidden_size,), jnp.float32) * 0.02
    params = (w1, b1, w2, b2)

    # One-time weight preprocessing (hoisted out of the per-call path).
    prepared = prepare_timestep_embedder_params(params, frequency_embedding_size)

    # Fractional timesteps, like diffusion timesteps.
    t = jax.random.uniform(k_t, (n,), jnp.float32, minval=0.0, maxval=1000.0)

    out = timestep_embedder(t, prepared)
    out = jax.block_until_ready(out)

    ref = timestep_embedder_ref(t, params, frequency_embedding_size)
    assert out.shape == (n, hidden_size)
    # bf16 weights on the memory-bound path -> compare at bf16-level tolerance.
    max_err = float(jnp.max(jnp.abs(out - ref)))
    assert jnp.allclose(out, ref, atol=5e-3, rtol=5e-2), max_err

    print("KERNEL_OK")
</pallas_src>

<mosaic_0001>
module attributes {stable_mosaic.version = 11 : i64} {
  func.func @_timestep_embedder_kernel(%arg0: i32, %arg1: memref<8x1xf32, #tpu.memory_space<vmem>>, %arg2: memref<128x128xbf16, #tpu.memory_space<vmem>>, %arg3: memref<128x128xbf16, #tpu.memory_space<vmem>>, %arg4: memref<1x128xf32, #tpu.memory_space<vmem>>, %arg5: memref<128x128xbf16, #tpu.memory_space<vmem>>, %arg6: memref<1x128xf32, #tpu.memory_space<vmem>>, %arg7: memref<8x128xf32, #tpu.memory_space<vmem>>) attributes {dimension_semantics = [#tpu.dimension_semantics<parallel>], iteration_bounds = array<i64: 1>, scalar_prefetch = 0 : i64, scratch_operands = 0 : i64, tpu.core_type = #tpu.core_type<tc>, window_params = [{transform_indices = @transform_0, window_bounds = array<i64: 8, 1>}, {pipeline_mode = #tpu.pipeline_mode<synchronous>, transform_indices = @transform_1, window_bounds = array<i64: 128, 128>}, {pipeline_mode = #tpu.pipeline_mode<synchronous>, transform_indices = @transform_2, window_bounds = array<i64: 128, 128>}, {pipeline_mode = #tpu.pipeline_mode<synchronous>, transform_indices = @transform_3, window_bounds = array<i64: 1, 128>}, {pipeline_mode = #tpu.pipeline_mode<synchronous>, transform_indices = @transform_4, window_bounds = array<i64: 128, 128>}, {pipeline_mode = #tpu.pipeline_mode<synchronous>, transform_indices = @transform_5, window_bounds = array<i64: 1, 128>}, {transform_indices = @transform_6, window_bounds = array<i64: 8, 128>}]} {
    %c0 = arith.constant 0 : index
    %c0_0 = arith.constant 0 : index
    %0 = vector.load %arg1[%c0, %c0_0] : memref<8x1xf32, #tpu.memory_space<vmem>>, vector<8x1xf32>
    %1 = tpu.iota {dimensions = array<i32: 1>} : vector<1x128xi32>
    %2 = arith.sitofp %1 : vector<1x128xi32> to vector<1x128xf32>
    %cst = arith.constant -0.0719557852 : f32
    %3 = vector.broadcast %cst : f32 to vector<1x128xf32>
    %4 = arith.mulf %2, %3 : vector<1x128xf32>
    %5 = math.exp %4 : vector<1x128xf32>
    %6 = vector.broadcast %0 : vector<8x1xf32> to vector<8x128xf32>
    %7 = vector.broadcast %5 : vector<1x128xf32> to vector<8x128xf32>
    %8 = arith.mulf %6, %7 : vector<8x128xf32>
    %9 = math.cos %8 : vector<8x128xf32>
    %10 = arith.truncf %9 : vector<8x128xf32> to vector<8x128xbf16>
    %11 = math.sin %8 : vector<8x128xf32>
    %12 = arith.truncf %11 : vector<8x128xf32> to vector<8x128xbf16>
    %c0_1 = arith.constant 0 : index
    %c0_2 = arith.constant 0 : index
    %13 = vector.load %arg2[%c0_1, %c0_2] : memref<128x128xbf16, #tpu.memory_space<vmem>>, vector<128x128xbf16>
    %cst_3 = arith.constant dense<0.000000e+00> : vector<8x128xf32>
    %14 = tpu.matmul %10, %13, %cst_3 {dimension_numbers = #tpu.dot_dimension_numbers<[1], [0], [0], [1], [0, 0, 1, 1], [], []>} : vector<8x128xbf16>, vector<128x128xbf16>, vector<8x128xf32> -> vector<8x128xf32>
    %c0_4 = arith.constant 0 : index
    %c0_5 = arith.constant 0 : index
    %15 = vector.load %arg3[%c0_4, %c0_5] : memref<128x128xbf16, #tpu.memory_space<vmem>>, vector<128x128xbf16>
    %cst_6 = arith.constant dense<0.000000e+00> : vector<8x128xf32>
    %16 = tpu.matmul %12, %15, %cst_6 {dimension_numbers = #tpu.dot_dimension_numbers<[1], [0], [0], [1], [0, 0, 1, 1], [], []>} : vector<8x128xbf16>, vector<128x128xbf16>, vector<8x128xf32> -> vector<8x128xf32>
    %17 = arith.addf %14, %16 : vector<8x128xf32>
    %c0_7 = arith.constant 0 : index
    %c0_8 = arith.constant 0 : index
    %18 = vector.load %arg4[%c0_7, %c0_8] : memref<1x128xf32, #tpu.memory_space<vmem>>, vector<1x128xf32>
    %19 = vector.broadcast %18 : vector<1x128xf32> to vector<8x128xf32>
    %20 = arith.addf %17, %19 : vector<8x128xf32>
    %21 = arith.negf %20 : vector<8x128xf32>
    %22 = math.exp %21 : vector<8x128xf32>
    %cst_9 = arith.constant 1.000000e+00 : f32
    %23 = vector.broadcast %cst_9 : f32 to vector<8x128xf32>
    %24 = arith.addf %23, %22 : vector<8x128xf32>
    %25 = arith.divf %23, %24 : vector<8x128xf32>
    %26 = arith.mulf %20, %25 : vector<8x128xf32>
    %27 = arith.truncf %26 : vector<8x128xf32> to vector<8x128xbf16>
    %c0_10 = arith.constant 0 : index
    %c0_11 = arith.constant 0 : index
    %28 = vector.load %arg5[%c0_10, %c0_11] : memref<128x128xbf16, #tpu.memory_space<vmem>>, vector<128x128xbf16>
    %cst_12 = arith.constant dense<0.000000e+00> : vector<8x128xf32>
    %29 = tpu.matmul %27, %28, %cst_12 {dimension_numbers = #tpu.dot_dimension_numbers<[1], [0], [0], [1], [0, 0, 1, 1], [], []>} : vector<8x128xbf16>, vector<128x128xbf16>, vector<8x128xf32> -> vector<8x128xf32>
    %c0_13 = arith.constant 0 : index
    %c0_14 = arith.constant 0 : index
    %30 = vector.load %arg6[%c0_13, %c0_14] : memref<1x128xf32, #tpu.memory_space<vmem>>, vector<1x128xf32>
    %31 = vector.broadcast %30 : vector<1x128xf32> to vector<8x128xf32>
    %32 = arith.addf %29, %31 : vector<8x128xf32>
    %c0_15 = arith.constant 0 : index
    %c0_16 = arith.constant 0 : index
    %33 = vector.load %arg7[%c0_15, %c0_16] : memref<8x128xf32, #tpu.memory_space<vmem>>, vector<8x128xf32>
    tpu.vector_store %arg7[%c0_15, %c0_16], %32 {strides = array<i32>} : memref<8x128xf32, #tpu.memory_space<vmem>>, vector<8x128xf32>,
    return
  }
  func.func @transform_0(%arg0: i32) -> (i32, i32) {
    %c0_i32 = arith.constant 0 : i32
    %c0_i32_0 = arith.constant 0 : i32
    return %arg0, %c0_i32 : i32, i32
  }
  func.func @transform_1(%arg0: i32) -> (i32, i32) {
    %c0_i32 = arith.constant 0 : i32
    %c0_i32_0 = arith.constant 0 : i32
    %c0_i32_1 = arith.constant 0 : i32
    return %c0_i32, %c0_i32_0 : i32, i32
  }
  func.func @transform_2(%arg0: i32) -> (i32, i32) {
    %c0_i32 = arith.constant 0 : i32
    %c0_i32_0 = arith.constant 0 : i32
    %c0_i32_1 = arith.constant 0 : i32
    return %c0_i32, %c0_i32_0 : i32, i32
  }
  func.func @transform_3(%arg0: i32) -> (i32, i32) {
    %c0_i32 = arith.constant 0 : i32
    %c0_i32_0 = arith.constant 0 : i32
    %c0_i32_1 = arith.constant 0 : i32
    return %c0_i32, %c0_i32_0 : i32, i32
  }
  func.func @transform_4(%arg0: i32) -> (i32, i32) {
    %c0_i32 = arith.constant 0 : i32
    %c0_i32_0 = arith.constant 0 : i32
    %c0_i32_1 = arith.constant 0 : i32
    return %c0_i32, %c0_i32_0 : i32, i32
  }
  func.func @transform_5(%arg0: i32) -> (i32, i32) {
    %c0_i32 = arith.constant 0 : i32
    %c0_i32_0 = arith.constant 0 : i32
    %c0_i32_1 = arith.constant 0 : i32
    return %c0_i32, %c0_i32_0 : i32, i32
  }
  func.func @transform_6(%arg0: i32) -> (i32, i32) {
    %c0_i32 = arith.constant 0 : i32
    %c0_i32_0 = arith.constant 0 : i32
    return %arg0, %c0_i32 : i32, i32
  }
}

</mosaic_0001>

<llo_original>
// kernel: tpu_custom_call.1
$region0: #{tpu_custom_call.1}
  #allocation0 [shape = 'u32[]', space=smem, size = 0x4, offset = 0x4, fixed_abs, tag = 'smem constant byte address 0x4 - core index']
  #allocation1 [shape = 'u32[72,128]{1,0:T(1,128)}', space=vmem, size = 0x9000, scoped, tag = 'internal scratch']
  %s0 = inlined_call_operand.vmem [shape: f32[8,1], index: 0, kind: input, shape index: {}]
  %s1 = inlined_call_operand.hbm [shape: bf16[128,128], index: 1, kind: input, shape index: {}]
  %s2 = inlined_call_operand.hbm [shape: bf16[128,128], index: 2, kind: input, shape index: {}]
  %s3 = inlined_call_operand.vmem [shape: f32[1,128], index: 3, kind: input, shape index: {}]
  %s4 = inlined_call_operand.hbm [shape: bf16[128,128], index: 4, kind: input, shape index: {}]
  %s5 = inlined_call_operand.vmem [shape: f32[1,128], index: 5, kind: input, shape index: {}]
  %s6 = inlined_call_operand.hbm [shape: f32[8,128], index: 6, kind: output, shape index: {}]
  %s7 = sld [smem:[#allocation0]]
  $region46: #{tpu_custom_call.1} parent=0
    _
  %s9 = ssub.s32 1, %s7
  %s10 = scalar_select 0, %s9, %s7
  $region1: #{tpu_custom_call.1} parent=0
    #allocation2 [shape = 'u8[32768]{0}', space=vmem, size = 0x8000, scoped, tag = 'input window, operand 1, single buffered']
    #allocation3 [shape = 's32[1]{0}', space=sflag, size = 0x4, scoped, tag = 'scoped memory for tpu_custom_call.1']
    #allocation4 [shape = 's32[1]{0}', space=sflag, size = 0x4, scoped, tag = 'scoped memory for tpu_custom_call.1']
    #allocation5 [shape = 'u8[32768]{0}', space=vmem, size = 0x8000, scoped, tag = 'input window, operand 2, single buffered']
    #allocation6 [shape = 's32[1]{0}', space=sflag, size = 0x4, scoped, tag = 'scoped memory for tpu_custom_call.1']
    #allocation7 [shape = 'u8[32768]{0}', space=vmem, size = 0x8000, scoped, tag = 'input window, operand 4, single buffered']
    #allocation8 [shape = 'u8[4096]{0}', space=vmem, size = 0x1000, scoped, tag = 'output window, operand 0, single buffered']
    %11 = vsyncpa [#allocation3], 0
    %12 = vsyncpa [#allocation6], 0
    %13 = vsyncpa [#allocation4], 0
    // Predicated region
    $region2: #{tpu_custom_call.1} parent=1 // pred_check
      _
    $region3: #{tpu_custom_call.1} parent=1 // pred_check_branch
      %15 = sbr.rel (0) target = $region5
    $region4: #{tpu_custom_call.1} parent=1 // pred_region
      _
    $region5: #{tpu_custom_call.1} parent=1 // pred_fallthru
      _
    // Predicated region
    $region6: #{tpu_custom_call.1} parent=1 // pred_check
      _
    $region7: #{tpu_custom_call.1} parent=1 // pred_check_branch
      %17 = sbr.rel (0) target = $region9
    $region8: #{tpu_custom_call.1} parent=1 // pred_region
      %19 = vsyncadd [#allocation3], 0
      %s20 = sshll.u32 %s1, 4
      %s21 = int_to_ptr.hbm [resolvable:$true] %s20
      %s22 = sshll.u32 [#allocation2], 4
      %s23 = int_to_ptr.vmem [resolvable:$true] %s22
      %28 = dma.hbm_to_vmem [thread:$0]  %s21, 1024, %s23, [#allocation3], 64, 64, 4
    $region9: #{tpu_custom_call.1} parent=1 // pred_fallthru
      _
    // Predicated region
    $region10: #{tpu_custom_call.1} parent=1 // pred_check
      _
    $region11: #{tpu_custom_call.1} parent=1 // pred_check_branch
      %30 = sbr.rel (0) target = $region13
    $region12: #{tpu_custom_call.1} parent=1 // pred_region
      %32 = vsyncadd [#allocation6], 0
      %s33 = sshll.u32 %s2, 4
      %s34 = int_to_ptr.hbm [resolvable:$true] %s33
      %s35 = sshll.u32 [#allocation5], 4
      %s36 = int_to_ptr.vmem [resolvable:$true] %s35
      %41 = dma.hbm_to_vmem [thread:$0]  %s34, 1024, %s36, [#allocation6], 64, 64, 4
    $region13: #{tpu_custom_call.1} parent=1 // pred_fallthru
      _
    // Predicated region
    $region14: #{tpu_custom_call.1} parent=1 // pred_check
      _
    $region15: #{tpu_custom_call.1} parent=1 // pred_check_branch
      %43 = sbr.rel (0) target = $region17
    $region16: #{tpu_custom_call.1} parent=1 // pred_region
      _
    $region17: #{tpu_custom_call.1} parent=1 // pred_fallthru
      _
    // Predicated region
    $region18: #{tpu_custom_call.1} parent=1 // pred_check
      _
    $region19: #{tpu_custom_call.1} parent=1 // pred_check_branch
      %45 = sbr.rel (0) target = $region21
    $region20: #{tpu_custom_call.1} parent=1 // pred_region
      %47 = vsyncadd [#allocation6], 0
      %s48 = sshll.u32 %s4, 4
      %s49 = int_to_ptr.hbm [resolvable:$true] %s48
      %s50 = sshll.u32 [#allocation7], 4
      %s51 = int_to_ptr.vmem [resolvable:$true] %s50
      %56 = dma.hbm_to_vmem [thread:$0]  %s49, 1024, %s51, [#allocation6], 64, 64, 4
    $region21: #{tpu_custom_call.1} parent=1 // pred_fallthru
      _
    // Predicated region
    $region22: #{tpu_custom_call.1} parent=1 // pred_check
      _
    $region23: #{tpu_custom_call.1} parent=1 // pred_check_branch
      %58 = sbr.rel (0) target = $region25
    $region24: #{tpu_custom_call.1} parent=1 // pred_region
      _
    $region25: #{tpu_custom_call.1} parent=1 // pred_fallthru
      _
    // Predicated region
    $region26: #{tpu_custom_call.1} parent=1 // pred_check
      _
    $region27: #{tpu_custom_call.1} parent=1 // pred_check_branch
      %60 = sbr.rel (0) target = $region29
    $region28: #{tpu_custom_call.1} parent=1 // pred_region
      %62 = dma.done [#allocation3], 1024
    $region29: #{tpu_custom_call.1} parent=1 // pred_fallthru
      _
    // Predicated region
    $region30: #{tpu_custom_call.1} parent=1 // pred_check
      _
    $region31: #{tpu_custom_call.1} parent=1 // pred_check_branch
      %64 = sbr.rel (0) target = $region33
    $region32: #{tpu_custom_call.1} parent=1 // pred_region
      %66 = dma.done [#allocation6], 1024
    $region33: #{tpu_custom_call.1} parent=1 // pred_fallthru
      _
    // Predicated region
    $region34: #{tpu_custom_call.1} parent=1 // pred_check
      _
    $region35: #{tpu_custom_call.1} parent=1 // pred_check_branch
      %68 = sbr.rel (0) target = $region37
    $region36: #{tpu_custom_call.1} parent=1 // pred_region
      %70 = dma.done [#allocation6], 1024
    $region37: #{tpu_custom_call.1} parent=1 // pred_fallthru
      _
    %v71 = vld [vmem:[%s0] sm:$0xff]
    %v72 = vlaneseq
    %v73 = vand.u32 %v72, 127
    %v74 = vcvt.s32.f32 %v73
    %v75 = vmul.f32 %v74, -0.071955785
    %v76 = vmul.f32 %v75, 1.442695
    %v77 = vpow.pop %v76
    %79 = vset.pattern.permute.xlu0 0
    %80 = vperm.xlu0 %79, %v71
    %v81 = vpop.permute.xlu0 %80
    %v83 = vmul.f32 %v81, %v77
    %v84 = vand.u32 2147483647, %v83
    %vm85 = vcmp.le.f32.partialorder %v84, 0.7853982
    %vm86 = vcmp.lt.s32.totalorder %v83, 0
    %v87 = vand.u32 %v83, 2139095040
    %v88 = vshrl.u32 %v87, 23
    %v89 = vsub.s32 %v88, 127
    %v90 = vand.u32 2147483647, %v83
    %v91 = vand.u32 %v90, 8388607
    %v92 = vor.u32 %v91, 8388608
    %v93 = vsub.s32 0, %v92
    %v94 = vadd.s32 %v89, 1
    %vm95 = vcmp.gt.s32.totalorder %v94, 0
    %v96 = vsel %vm95, %v94, 0
    %v97 = vshrl.u32 %v96, 5
    %v98 = vand.u32 %v96, 31
    %v99 = vsub.s32 32, %v98
    %v100 = vshrl.u32 683565275, %v99
    %v101 = vshll.u32 683565275, %v98
    %v102 = vshrl.u32 2475754826, %v99
    %v103 = vor.u32 %v101, %v102
    %v104 = vshll.u32 2475754826, %v98
    %v105 = vshrl.u32 2131351028, %v99
    %v106 = vor.u32 %v104, %v105
    %v107 = vshll.u32 2131351028, %v98
    %v108 = vshrl.u32 2102212464, %v99
    %v109 = vor.u32 %v107, %v108
    %v110 = vshll.u32 2102212464, %v98
    %v111 = vshrl.u32 920167782, %v99
    %v112 = vor.u32 %v110, %v111
    %v113 = vshll.u32 920167782, %v98
    %v114 = vshrl.u32 1326507024, %v99
    %v115 = vor.u32 %v113, %v114
    %vm116 = vcmp.lt.s32.totalorder %v97, 1
    %vm117 = vcmp.lt.s32.totalorder %v97, 2
    %vm118 = vcmp.lt.s32.totalorder %v97, 3
    %vm119 = vcmp.lt.s32.totalorder %v97, 4
    %v120 = vsel %vm116, %v100, %v103
    %v121 = vsel %vm119, %v109, 2102212464
    %v122 = vsel %vm118, %v106, %v121
    %v123 = vsel %vm117, %v120, %v122
    %v124 = vsel %vm116, %v103, %v106
    %v125 = vsel %vm119, %v112, 920167782
    %v126 = vsel %vm118, %v109, %v125
    %v127 = vsel %vm117, %v124, %v126
    %v128 = vsel %vm116, %v106, %v109
    %v129 = vsel %vm119, %v115, 1326507024
    %v130 = vsel %vm118, %v112, %v129
    %v131 = vsel %vm117, %v128, %v130
    %v132 = vshll.u32 %v92, 8
    %v133 = vand.u32 %v132, 65535
    %v134 = vshrl.u32 %v132, 16
    %v135 = vand.u32 %v131, 65535
    %v136 = vshrl.u32 %v131, 16
    %v137 = vmul.u32 %v133, %v135
    %v138 = vmul.u32 %v133, %v136
    %v139 = vmul.u32 %v134, %v135
    %v140 = vmul.u32 %v134, %v136
    %v141 = vshll.u32 %v138, 16
    %v142 = vshrl.u32 %v138, 16
    %v143 = vshll.u32 %v139, 16
    %v144 = vshrl.u32 %v139, 16
    %vm145 = vc.u32 %v137, %v141
    %v146 = vsel %vm145, 1, 0
    %v147 = vadd.s32 %v137, %v141
    %v148 = vadd.s32 %v140, %v146
    %vm149 = vc.u32 %v147, %v143
    %v150 = vsel %vm149, 1, 0
    %v151 = vadd.s32 %v147, %v143
    %v152 = vadd.s32 %v148, %v150
    %v153 = vadd.s32 %v152, %v142
    %v154 = vadd.s32 %v153, %v144
    %v155 = vand.u32 %v132, 65535
    %v156 = vshrl.u32 %v132, 16
    %v157 = vand.u32 %v127, 65535
    %v158 = vshrl.u32 %v127, 16
    %v159 = vmul.u32 %v155, %v157
    %v160 = vmul.u32 %v155, %v158
    %v161 = vmul.u32 %v156, %v157
    %v162 = vmul.u32 %v156, %v158
    %v163 = vshll.u32 %v160, 16
    %v164 = vshrl.u32 %v160, 16
    %v165 = vshll.u32 %v161, 16
    %v166 = vshrl.u32 %v161, 16
    %vm167 = vc.u32 %v159, %v163
    %v168 = vsel %vm167, 1, 0
    %v169 = vadd.s32 %v159, %v163
    %v170 = vadd.s32 %v162, %v168
    %vm171 = vc.u32 %v169, %v165
    %v172 = vsel %vm171, 1, 0
    %v173 = vadd.s32 %v169, %v165
    %v174 = vadd.s32 %v170, %v172
    %v175 = vadd.s32 %v174, %v164
    %v176 = vadd.s32 %v175, %v166
    %v177 = vmul.u32 %v132, %v123
    %v178 = vadd.s32 %v154, %v173
    %vm179 = vc.u32 %v154, %v173
    %v180 = vadd.s32 %v176, 1
    %v181 = vsel %vm179, %v180, %v176
    %v182 = vadd.s32 %v177, %v181
    %v183 = vadd.s32 %v182, 536870912
    %v184 = vshrl.u32 %v183, 30
    %v185 = vshll.u32 %v184, 30
    %v186 = vsub.s32 %v182, %v185
    %vm187 = vcmp.lt.s32.totalorder %v186, 0
    %v188 = vsub.s32 0, %v186
    %v189 = vsel %vm187, %v188, %v186
    %v190 = vclz %v189
    %v191 = vsub.s32 %v190, 2
    %vm192 = vcmp.gt.s32.totalorder 0, %v191
    %v193 = vsel %vm192, 0, %v191
    %v194 = vsub.s32 32, %v193
    %v195 = vshll.u32 %v186, %v193
    %v196 = vshrl.u32 %v178, %v194
    %v197 = vor.u32 %v195, %v196
    %v198 = vsub.s32 4294967266, %v193
    %v199 = vadd.s32 %v198, 127
    %v200 = vshll.u32 %v199, 23
    %v201 = vor.u32 4788187, %v200
    %v202 = vand.u32 2147483647, %v201
    %v204 = vcvt.s32.f32 %v197
    %v205 = vmul.f32 %v204, %v202
    %v206 = vxor.u32 %v205, 2147483648
    %v207 = vsel %vm86, %v206, %v205
    %v208 = vsub.s32 4, %v184
    %v209 = vsel %vm86, %v208, %v184
    %v210 = vsel %vm85, %v83, %v207
    %v211 = vsel %vm85, 0, %v209
    %v212 = vmul.f32 %v210, %v210
    %v213 = vmul.f32 %v212, -0.001358992
    %v214 = vadd.f32 %v213, 0.041655596
    %v215 = vmul.f32 %v212, %v214
    %v216 = vadd.f32 %v215, -0.4999988
    %v217 = vmul.f32 %v212, %v216
    %v218 = vadd.f32 1.0, %v217
    %v219 = vmul.f32 %v210, %v210
    %v220 = vmul.f32 %v219, -0.00019511016
    %v221 = vadd.f32 %v220, 0.008332121
    %v222 = vmul.f32 %v219, %v221
    %v223 = vadd.f32 %v222, -0.16666654
    %v224 = vmul.f32 %v219, %v223
    %v225 = vadd.f32 %v224, 1.0
    %v226 = vmul.f32 %v225, %v210
    %vm227 = vweird.f32 %v83
    %v228 = vand.u32 %v211, 3
    %vm229 = vcmp.lt.s32.totalorder %v228, 2
    %vm230 = vcmp.eq.s32.totalorder %v228, 0
    %v231 = vxor.u32 %v226, 2147483648
    %v232 = vsel %vm230, %v218, %v231
    %vm233 = vcmp.eq.s32.totalorder %v228, 2
    %v234 = vxor.u32 %v218, 2147483648
    %v235 = vsel %vm233, %v234, %v226
    %v236 = vsel %vm229, %v232, %v235
    %v237 = vsel %vm227, nan, %v236
    %v238 = vpack.c.bf16 %v237, %v237
    %v239 = vand.u32 2147483647, %v83
    %vm240 = vcmp.le.f32.partialorder %v239, 0.7853982
    %vm241 = vcmp.lt.s32.totalorder %v83, 0
    %v242 = vand.u32 %v83, 2139095040
    %v243 = vshrl.u32 %v242, 23
    %v244 = vsub.s32 %v243, 127
    %v245 = vand.u32 2147483647, %v83
    %v246 = vand.u32 %v245, 8388607
    %v247 = vor.u32 %v246, 8388608
    %v248 = vsub.s32 0, %v247
    %v249 = vadd.s32 %v244, 1
    %vm250 = vcmp.gt.s32.totalorder %v249, 0
    %v251 = vsel %vm250, %v249, 0
    %v252 = vshrl.u32 %v251, 5
    %v253 = vand.u32 %v251, 31
    %v254 = vsub.s32 32, %v253
    %v255 = vshrl.u32 683565275, %v254
    %v256 = vshll.u32 683565275, %v253
    %v257 = vshrl.u32 2475754826, %v254
    %v258 = vor.u32 %v256, %v257
    %v259 = vshll.u32 2475754826, %v253
    %v260 = vshrl.u32 2131351028, %v254
    %v261 = vor.u32 %v259, %v260
    %v262 = vshll.u32 2131351028, %v253
    %v263 = vshrl.u32 2102212464, %v254
    %v264 = vor.u32 %v262, %v263
    %v265 = vshll.u32 2102212464, %v253
    %v266 = vshrl.u32 920167782, %v254
    %v267 = vor.u32 %v265, %v266
    %v268 = vshll.u32 920167782, %v253
    %v269 = vshrl.u32 1326507024, %v254
    %v270 = vor.u32 %v268, %v269
    %vm271 = vcmp.lt.s32.totalorder %v252, 1
    %vm272 = vcmp.lt.s32.totalorder %v252, 2
    %vm273 = vcmp.lt.s32.totalorder %v252, 3
    %vm274 = vcmp.lt.s32.totalorder %v252, 4
    %v275 = vsel %vm271, %v255, %v258
    %v276 = vsel %vm274, %v264, 2102212464
    %v277 = vsel %vm273, %v261, %v276
    %v278 = vsel %vm272, %v275, %v277
    %v279 = vsel %vm271, %v258, %v261
    %v280 = vsel %vm274, %v267, 920167782
    %v281 = vsel %vm273, %v264, %v280
    %v282 = vsel %vm272, %v279, %v281
    %v283 = vsel %vm271, %v261, %v264
    %v284 = vsel %vm274, %v270, 1326507024
    %v285 = vsel %vm273, %v267, %v284
    %v286 = vsel %vm272, %v283, %v285
    %v287 = vshll.u32 %v247, 8
    %v288 = vand.u32 %v287, 65535
    %v289 = vshrl.u32 %v287, 16
    %v290 = vand.u32 %v286, 65535
    %v291 = vshrl.u32 %v286, 16
    %v292 = vmul.u32 %v288, %v290
    %v293 = vmul.u32 %v288, %v291
    %v294 = vmul.u32 %v289, %v290
    %v295 = vmul.u32 %v289, %v291
    %v296 = vshll.u32 %v293, 16
    %v297 = vshrl.u32 %v293, 16
    %v298 = vshll.u32 %v294, 16
    %v299 = vshrl.u32 %v294, 16
    %vm300 = vc.u32 %v292, %v296
    %v301 = vsel %vm300, 1, 0
    %v302 = vadd.s32 %v292, %v296
    %v303 = vadd.s32 %v295, %v301
    %vm304 = vc.u32 %v302, %v298
    %v305 = vsel %vm304, 1, 0
    %v306 = vadd.s32 %v302, %v298
    %v307 = vadd.s32 %v303, %v305
    %v308 = vadd.s32 %v307, %v297
    %v309 = vadd.s32 %v308, %v299
    %v310 = vand.u32 %v287, 65535
    %v311 = vshrl.u32 %v287, 16
    %v312 = vand.u32 %v282, 65535
    %v313 = vshrl.u32 %v282, 16
    %v314 = vmul.u32 %v310, %v312
    %v315 = vmul.u32 %v310, %v313
    %v316 = vmul.u32 %v311, %v312
    %v317 = vmul.u32 %v311, %v313
    %v318 = vshll.u32 %v315, 16
    %v319 = vshrl.u32 %v315, 16
    %v320 = vshll.u32 %v316, 16
    %v321 = vshrl.u32 %v316, 16
    %vm322 = vc.u32 %v314, %v318
    %v323 = vsel %vm322, 1, 0
    %v324 = vadd.s32 %v314, %v318
    %v325 = vadd.s32 %v317, %v323
    %vm326 = vc.u32 %v324, %v320
    %v327 = vsel %vm326, 1, 0
    %v328 = vadd.s32 %v324, %v320
    %v329 = vadd.s32 %v325, %v327
    %v330 = vadd.s32 %v329, %v319
    %v331 = vadd.s32 %v330, %v321
    %v332 = vmul.u32 %v287, %v278
    %v333 = vadd.s32 %v309, %v328
    %vm334 = vc.u32 %v309, %v328
    %v335 = vadd.s32 %v331, 1
    %v336 = vsel %vm334, %v335, %v331
    %v337 = vadd.s32 %v332, %v336
    %v338 = vadd.s32 %v337, 536870912
    %v339 = vshrl.u32 %v338, 30
    %v340 = vshll.u32 %v339, 30
    %v341 = vsub.s32 %v337, %v340
    %vm342 = vcmp.lt.s32.totalorder %v341, 0
    %v343 = vsub.s32 0, %v341
    %v344 = vsel %vm342, %v343, %v341
    %v345 = vclz %v344
    %v346 = vsub.s32 %v345, 2
    %vm347 = vcmp.gt.s32.totalorder 0, %v346
    %v348 = vsel %vm347, 0, %v346
    %v349 = vsub.s32 32, %v348
    %v350 = vshll.u32 %v341, %v348
    %v351 = vshrl.u32 %v333, %v349
    %v352 = vor.u32 %v350, %v351
    %v353 = vsub.s32 4294967266, %v348
    %v354 = vadd.s32 %v353, 127
    %v355 = vshll.u32 %v354, 23
    %v356 = vor.u32 4788187, %v355
    %v357 = vand.u32 2147483647, %v356
    %v359 = vcvt.s32.f32 %v352
    %v360 = vmul.f32 %v359, %v357
    %v361 = vxor.u32 %v360, 2147483648
    %v362 = vsel %vm241, %v361, %v360
    %v363 = vsub.s32 4, %v339
    %v364 = vsel %vm241, %v363, %v339
    %v365 = vsel %vm240, %v83, %v362
    %v366 = vsel %vm240, 0, %v364
    %v367 = vmul.f32 %v365, %v365
    %v368 = vmul.f32 %v367, -0.001358992
    %v369 = vadd.f32 %v368, 0.041655596
    %v370 = vmul.f32 %v367, %v369
    %v371 = vadd.f32 %v370, -0.4999988
    %v372 = vmul.f32 %v367, %v371
    %v373 = vadd.f32 1.0, %v372
    %v374 = vmul.f32 %v365, %v365
    %v375 = vmul.f32 %v374, -0.00019511016
    %v376 = vadd.f32 %v375, 0.008332121
    %v377 = vmul.f32 %v374, %v376
    %v378 = vadd.f32 %v377, -0.16666654
    %v379 = vmul.f32 %v374, %v378
    %v380 = vadd.f32 %v379, 1.0
    %v381 = vmul.f32 %v380, %v365
    %vm382 = vweird.f32 %v83
    %v383 = vadd.s32 %v366, 3
    %v384 = vand.u32 %v383, 3
    %vm385 = vcmp.lt.s32.totalorder %v384, 2
    %vm386 = vcmp.eq.s32.totalorder %v384, 0
    %v387 = vxor.u32 %v381, 2147483648
    %v388 = vsel %vm386, %v373, %v387
    %vm389 = vcmp.eq.s32.totalorder %v384, 2
    %v390 = vxor.u32 %v373, 2147483648
    %v391 = vsel %vm389, %v390, %v381
    %v392 = vsel %vm385, %v388, %v391
    %v393 = vsel %vm382, nan, %v392
    %v394 = vpack.c.bf16 %v393, %v393
    %v395 = vld [vmem:[#allocation2] sm:$0xf]
    %v396 = vld [vmem:[#allocation2 + $0x4] sm:$0xf]
    %v397 = vld [vmem:[#allocation2 + $0x8] sm:$0xf]
    %v398 = vld [vmem:[#allocation2 + $0xc] sm:$0xf]
    %v399 = vld [vmem:[#allocation2 + $0x10] sm:$0xf]
    %v400 = vld [vmem:[#allocation2 + $0x14] sm:$0xf]
    %v401 = vld [vmem:[#allocation2 + $0x18] sm:$0xf]
    %v402 = vld [vmem:[#allocation2 + $0x1c] sm:$0xf]
    %v403 = vld [vmem:[#allocation2 + $0x20] sm:$0xf]
    %v404 = vld [vmem:[#allocation2 + $0x24] sm:$0xf]
    %v405 = vld [vmem:[#allocation2 + $0x28] sm:$0xf]
    %v406 = vld [vmem:[#allocation2 + $0x2c] sm:$0xf]
    %v407 = vld [vmem:[#allocation2 + $0x30] sm:$0xf]
    %v408 = vld [vmem:[#allocation2 + $0x34] sm:$0xf]
    %v409 = vld [vmem:[#allocation2 + $0x38] sm:$0xf]
    %v410 = vld [vmem:[#allocation2 + $0x3c] sm:$0xf]
    %v411 = vld [vmem:[#allocation5] sm:$0xf]
    %v412 = vld [vmem:[#allocation5 + $0x4] sm:$0xf]
    %v413 = vld [vmem:[#allocation5 + $0x8] sm:$0xf]
    %v414 = vld [vmem:[#allocation5 + $0xc] sm:$0xf]
    %v415 = vld [vmem:[#allocation5 + $0x10] sm:$0xf]
    %v416 = vld [vmem:[#allocation5 + $0x14] sm:$0xf]
    %v417 = vld [vmem:[#allocation5 + $0x18] sm:$0xf]
    %v418 = vld [vmem:[#allocation5 + $0x1c] sm:$0xf]
    %v419 = vld [vmem:[#allocation5 + $0x20] sm:$0xf]
    %v420 = vld [vmem:[#allocation5 + $0x24] sm:$0xf]
    %v421 = vld [vmem:[#allocation5 + $0x28] sm:$0xf]
    %v422 = vld [vmem:[#allocation5 + $0x2c] sm:$0xf]
    %v423 = vld [vmem:[#allocation5 + $0x30] sm:$0xf]
    %v424 = vld [vmem:[#allocation5 + $0x34] sm:$0xf]
    %v425 = vld [vmem:[#allocation5 + $0x38] sm:$0xf]
    %v426 = vld [vmem:[#allocation5 + $0x3c] sm:$0xf]
    %v443 = vunpack.c.l.b16 %v411
    %v444 = vunpack.c.l.b16 %v412
    %v445 = vunpack.c.l.b16 %v413
    %v446 = vunpack.c.l.b16 %v414
    %v447 = vunpack.c.l.b16 %v415
    %v448 = vunpack.c.l.b16 %v416
    %v449 = vunpack.c.l.b16 %v417
    %v450 = vunpack.c.l.b16 %v418
    %v451 = vunpack.c.l.b16 %v419
    %v452 = vunpack.c.l.b16 %v420
    %v453 = vunpack.c.l.b16 %v421
    %v454 = vunpack.c.l.b16 %v422
    %v455 = vunpack.c.l.b16 %v423
    %v456 = vunpack.c.l.b16 %v424
    %v457 = vunpack.c.l.b16 %v425
    %v458 = vunpack.c.l.b16 %v426
    %v459 = vpack.c.b16 %v444, %v443
    %v460 = vpack.c.b16 %v446, %v445
    %v461 = vpack.c.b16 %v448, %v447
    %v462 = vpack.c.b16 %v450, %v449
    %v463 = vpack.c.b16 %v452, %v451
    %v464 = vpack.c.b16 %v454, %v453
    %v465 = vpack.c.b16 %v456, %v455
    %v466 = vpack.c.b16 %v458, %v457
    %475 = vmatpush.bf16.msra.mxu0 %v466
    %476 = vmatpush.bf16.msra.mxu0 %v465
    %477 = vmatpush.bf16.msra.mxu0 %v464
    %478 = vmatpush.bf16.msra.mxu0 %v463
    %479 = vmatpush.bf16.msra.mxu0 %v462
    %480 = vmatpush.bf16.msra.mxu0 %v461
    %481 = vmatpush.bf16.msra.mxu0 %v460
    %482 = vmatpush.bf16.msra.mxu0 %v459
    %483 = vmatmul.bf16.gmra.mxu0 %v394
    %v484 = vpop.f32.mrf.mxu0
    %v485 = vadd.f32 0.0, %v484
    %v486 = vpop.f32.mrf.mxu0
    %487 = vdwg.mxu0
    %v504 = vunpack.c.l.b16 %v395
    %v505 = vunpack.c.l.b16 %v396
    %v506 = vunpack.c.l.b16 %v397
    %v507 = vunpack.c.l.b16 %v398
    %v508 = vunpack.c.l.b16 %v399
    %v509 = vunpack.c.l.b16 %v400
    %v510 = vunpack.c.l.b16 %v401
    %v511 = vunpack.c.l.b16 %v402
    %v512 = vunpack.c.l.b16 %v403
    %v513 = vunpack.c.l.b16 %v404
    %v514 = vunpack.c.l.b16 %v405
    %v515 = vunpack.c.l.b16 %v406
    %v516 = vunpack.c.l.b16 %v407
    %v517 = vunpack.c.l.b16 %v408
    %v518 = vunpack.c.l.b16 %v409
    %v519 = vunpack.c.l.b16 %v410
    %v520 = vpack.c.b16 %v505, %v504
    %v521 = vpack.c.b16 %v507, %v506
    %v522 = vpack.c.b16 %v509, %v508
    %v523 = vpack.c.b16 %v511, %v510
    %v524 = vpack.c.b16 %v513, %v512
    %v525 = vpack.c.b16 %v515, %v514
    %v526 = vpack.c.b16 %v517, %v516
    %v527 = vpack.c.b16 %v519, %v518
    %536 = vmatpush.bf16.msra.mxu0 %v527
    %537 = vmatpush.bf16.msra.mxu0 %v526
    %538 = vmatpush.bf16.msra.mxu0 %v525
    %539 = vmatpush.bf16.msra.mxu0 %v524
    %540 = vmatpush.bf16.msra.mxu0 %v523
    %541 = vmatpush.bf16.msra.mxu0 %v522
    %542 = vmatpush.bf16.msra.mxu0 %v521
    %543 = vmatpush.bf16.msra.mxu0 %v520
    %544 = vmatmul.bf16.gmra.mxu0 %v238
    %v545 = vpop.f32.mrf.mxu0
    %v546 = vadd.f32 %v485, %v545
    %v547 = vpop.f32.mrf.mxu0
    %548 = vdwg.mxu0
    %v549 = vld [vmem:[%s3] sm:$0x1]
    %v551 = vperm.slane %v549, 0
    %v553 = vadd.f32 %v546, %v551
    %v554 = vxor.u32 %v553, 2147483648
    %v555 = vmul.f32 %v554, 1.442695
    %v556 = vpow.pop %v555
    %v557 = vadd.f32 %v556, 1.0
    %v558 = vrcp.pop %v557
    %v559 = vmul.f32 %v557, %v558
    %v560 = vsub.f32 1.0, %v559
    %v561 = vmul.f32 %v558, %v560
    %v562 = vadd.f32 %v558, %v561
    %vm563 = vweird.f32 %v557
    %vm564 = vweird.f32 %v558
    %vm565 = vmor %vm563, %vm564
    %v566 = vsel %vm565, %v558, %v562
    %v567 = vand.u32 2147483647, %v557
    %vm568 = vcmp.eq.f32.partialorder %v567, 8.507059e+37
    %v569 = vand.u32 %v557, 2147483648
    %v570 = vor.u32 1.1754944e-38, %v569
    %v571 = vsel %vm568, %v570, %v566
    %v572 = vmul.f32 1.0, %v571
    %v573 = vmul.f32 %v553, %v572
    %v574 = vpack.c.bf16 %v573, %v573
    %v575 = vld [vmem:[#allocation7] sm:$0xf]
    %v576 = vld [vmem:[#allocation7 + $0x4] sm:$0xf]
    %v577 = vld [vmem:[#allocation7 + $0x8] sm:$0xf]
    %v578 = vld [vmem:[#allocation7 + $0xc] sm:$0xf]
    %v579 = vld [vmem:[#allocation7 + $0x10] sm:$0xf]
    %v580 = vld [vmem:[#allocation7 + $0x14] sm:$0xf]
    %v581 = vld [vmem:[#allocation7 + $0x18] sm:$0xf]
    %v582 = vld [vmem:[#allocation7 + $0x1c] sm:$0xf]
    %v583 = vld [vmem:[#allocation7 + $0x20] sm:$0xf]
    %v584 = vld [vmem:[#allocation7 + $0x24] sm:$0xf]
    %v585 = vld [vmem:[#allocation7 + $0x28] sm:$0xf]
    %v586 = vld [vmem:[#allocation7 + $0x2c] sm:$0xf]
    %v587 = vld [vmem:[#allocation7 + $0x30] sm:$0xf]
    %v588 = vld [vmem:[#allocation7 + $0x34] sm:$0xf]
    %v589 = vld [vmem:[#allocation7 + $0x38] sm:$0xf]
    %v590 = vld [vmem:[#allocation7 + $0x3c] sm:$0xf]
    %v591 = vld [vmem:[%s5] sm:$0x1]
    %v593 = vperm.slane %v591, 0
    %v611 = vunpack.c.l.b16 %v575
    %v612 = vunpack.c.l.b16 %v576
    %v613 = vunpack.c.l.b16 %v577
    %v614 = vunpack.c.l.b16 %v578
    %v615 = vunpack.c.l.b16 %v579
    %v616 = vunpack.c.l.b16 %v580
    %v617 = vunpack.c.l.b16 %v581
    %v618 = vunpack.c.l.b16 %v582
    %v619 = vunpack.c.l.b16 %v583
    %v620 = vunpack.c.l.b16 %v584
    %v621 = vunpack.c.l.b16 %v585
    %v622 = vunpack.c.l.b16 %v586
    %v623 = vunpack.c.l.b16 %v587
    %v624 = vunpack.c.l.b16 %v588
    %v625 = vunpack.c.l.b16 %v589
    %v626 = vunpack.c.l.b16 %v590
    %v627 = vpack.c.b16 %v612, %v611
    %v628 = vpack.c.b16 %v614, %v613
    %v629 = vpack.c.b16 %v616, %v615
    %v630 = vpack.c.b16 %v618, %v617
    %v631 = vpack.c.b16 %v620, %v619
    %v632 = vpack.c.b16 %v622, %v621
    %v633 = vpack.c.b16 %v624, %v623
    %v634 = vpack.c.b16 %v626, %v625
    %643 = vmatpush.bf16.msra.mxu0 %v634
    %644 = vmatpush.bf16.msra.mxu0 %v633
    %645 = vmatpush.bf16.msra.mxu0 %v632
    %646 = vmatpush.bf16.msra.mxu0 %v631
    %647 = vmatpush.bf16.msra.mxu0 %v630
    %648 = vmatpush.bf16.msra.mxu0 %v629
    %649 = vmatpush.bf16.msra.mxu0 %v628
    %650 = vmatpush.bf16.msra.mxu0 %v627
    %651 = vmatmul.bf16.gmra.mxu0 %v574
    %v652 = vpop.f32.mrf.mxu0
    %v653 = vadd.f32 %v593, %v652
    %v654 = vpop.f32.mrf.mxu0
    %655 = vdwg.mxu0
    %656 = vst [vmem:[#allocation8] sm:$0xff] %v653
    // Predicated region
    $region38: #{tpu_custom_call.1} parent=1 // pred_check
      _
    $region39: #{tpu_custom_call.1} parent=1 // pred_check_branch
      %658 = sbr.rel (0) target = $region41
    $region40: #{tpu_custom_call.1} parent=1 // pred_region
      %660 = vsyncadd [#allocation4], 0
      %s662 = sshll.u32 [#allocation8], 4
      %s663 = int_to_ptr.vmem [resolvable:$true] %s662
      %s664 = sshll.u32 %s6, 4
      %s665 = int_to_ptr.hbm [resolvable:$true] %s664
      %667 = dma.vmem_to_hbm [thread:$0]  %s663, 128, %s665, [#allocation4]
    $region41: #{tpu_custom_call.1} parent=1 // pred_fallthru
      _
    // Predicated region
    $region42: #{tpu_custom_call.1} parent=1 // pred_check
      _
    $region43: #{tpu_custom_call.1} parent=1 // pred_check_branch
      %669 = sbr.rel (0) target = $region45
    $region44: #{tpu_custom_call.1} parent=1 // pred_region
      %671 = dma.done [#allocation4], 128
    $region45: #{tpu_custom_call.1} parent=1 // pred_fallthru
      _
    %672 = vsyncpa [#allocation3], 1
    %673 = vsyncpa [#allocation6], 1
    %674 = vsyncpa [#allocation4], 1

</llo_original>
